<compile_context>
chip_gen: v5e
topology: v5e:2x2
jax: 0.10.0
libtpu: 0.0.40
codegen_flags: <defaults>
</compile_context>

<pallas_src>
import jax
import jax.numpy as jnp
import numpy as np
from jax.experimental import pallas as pl
from jax.experimental.pallas import tpu as pltpu


def _round_up(a, m):
    return ((a + m - 1) // m) * m


def _physical_vmem_bytes():
    try:
        return int(pltpu.get_tpu_info().vmem_capacity_bytes)
    except Exception:
        return 64 * 1024 * 1024  # conservative: v7x per-TensorCore VMEM


def _linear1_kernel(x_ref, w_ref, b_ref, o_ref):
    # x_ref: (tm, D) VMEM tile (streamed)
    # w_ref: (1, D)  VMEM (resident across the grid: index_map -> (0, 0))
    # b_ref: (1, 1)  SMEM scalar
    # o_ref: (1, tm) lane-dense output block
    x = x_ref[...]
    w = w_ref[...]                       # already x.dtype (pre-cast in wrapper)
    # (1, D) . (tm, D)^T over D -> (1, tm): MXU contraction, f32 accumulation,
    # result is already lane-dense for an unmasked contiguous store.
    y = jax.lax.dot_general(
        w, x,
        dimension_numbers=(((1,), (1,)), ((), ())),
        precision=jax.lax.Precision.HIGHEST,   # hidden under the x DMA; keeps f32 parity
        preferred_element_type=jnp.float32,
    )
    y = y + b_ref[0, 0].astype(jnp.float32)
    o_ref[...] = y.astype(o_ref.dtype)


def domain_classifier_linear_fwd(x, w, b, *, tm=None, force_pallas=False):
    """Forward of domain_classifier_linear.

    x: (B, D) activations (f32 or bf16 -- feed bf16 from the producer to halve
       HBM traffic; accumulation is always f32),
    w: (1, D) Linear weight, b: bias (any shape with 1 element).
    Returns (B, 1) in x.dtype.
    """
    B, D = x.shape
    assert w.shape == (1, D), w.shape
    b = jnp.asarray(b).reshape(1, 1)
    w = w.astype(x.dtype)                          # pre-cast once, outside the kernel

    itemsize = jnp.dtype(x.dtype).itemsize

    # Small-input fallback: a fused XLA GEMV beats pallas_call launch overhead.
    if not force_pallas and B * D * itemsize < (2 << 20):
        y = jax.lax.dot_general(
            x, w,
            dimension_numbers=(((1,), (1,)), ((), ())),
            precision=jax.lax.Precision.HIGHEST,
            preferred_element_type=jnp.float32,
        ) + b.astype(jnp.float32)
        return y.astype(x.dtype)

    phys_vmem = _physical_vmem_bytes()
    D_pad = _round_up(D, 128)                      # lane-padded row footprint

    if tm is None:
        # Byte-targeted tile: ~16 MiB of x per buffer (2x buffered by Pallas),
        # clamped so the double-buffered tile stays well inside physical VMEM.
        budget = min(16 * 1024 * 1024, int(0.30 * phys_vmem))
        tm = max(128, (budget // (D_pad * itemsize)) // 128 * 128)

    # 128-multiple keeps the (tm, D) x block sublane-aligned and the lane-dense
    # (1, tm) output block lane-aligned.  A single full-array block is always legal.
    tm = max(128, (tm // 128) * 128)
    if tm >= B:
        tm = B
    grid = pl.cdiv(B, tm)                          # ragged tail handled by Pallas masking

    # Honest VMEM estimate (lane/sublane padded): 2x x tile + 2x weight row +
    # 2x output block (padded to native (8,128) tiles) + slack.
    out_tile_bytes = 2 * 8 * _round_up(tm, 128) * 4
    vmem_need = (2 * tm * D_pad * itemsize
                 + 2 * D_pad * itemsize
                 + out_tile_bytes
                 + (2 << 20))
    vmem_limit = int(min(max(32 * 1024 * 1024, vmem_need),
                         int(0.9 * phys_vmem)))

    out = pl.pallas_call(
        _linear1_kernel,
        out_shape=jax.ShapeDtypeStruct((1, B), x.dtype),
        grid_spec=pltpu.PrefetchScalarGridSpec(
            num_scalar_prefetch=0,
            grid=(grid,),
            in_specs=[
                pl.BlockSpec((tm, D), lambda i: (i, 0)),             # streamed x rows
                pl.BlockSpec((1, D), lambda i: (0, 0)),              # weight, resident
                pl.BlockSpec(memory_space=pltpu.MemorySpace.SMEM),   # bias scalar
            ],
            out_specs=pl.BlockSpec((1, tm), lambda i: (0, i)),       # lane-dense output
        ),
        compiler_params=pltpu.CompilerParams(
            dimension_semantics=("parallel",),     # batch axis shards across TCs
            vmem_limit_bytes=vmem_limit,
        ),
    )(x, w, b)

    return out.reshape(B, 1)


def _ref(x, w, b):
    x64 = np.asarray(x, dtype=np.float64)
    w64 = np.asarray(w, dtype=np.float64)
    b64 = np.asarray(b, dtype=np.float64).reshape(1, 1)
    return x64 @ w64.T + b64


if __name__ == "__main__":
    key = jax.random.PRNGKey(0)
    kx, kw, kb, kx2 = jax.random.split(key, 4)

    # 1) Small shape, forced through the Pallas kernel (single full-array block).
    B, D = 8, 256
    bound = 1.0 / np.sqrt(D)
    x = jax.random.normal(kx, (B, D), dtype=jnp.float32)
    w = jax.random.uniform(kw, (1, D), jnp.float32, -bound, bound)
    b = jax.random.uniform(kb, (1, 1), jnp.float32, -bound, bound)

    y = jax.block_until_ready(domain_classifier_linear_fwd(x, w, b, force_pallas=True))
    assert y.shape == (B, 1)
    np.testing.assert_allclose(np.asarray(y), _ref(x, w, b), atol=2e-3, rtol=2e-3)

    # 2) Module-default input_dim, batch NOT divisible by the tile
    #    (exercises the ragged last block + multi-step grid, no jnp.pad).
    B2, D2 = 300, 1200
    bound2 = 1.0 / np.sqrt(D2)
    x2 = jax.random.normal(kx2, (B2, D2), dtype=jnp.float32)
    w2 = jax.random.uniform(kw, (1, D2), jnp.float32, -bound2, bound2)
    b2 = jax.random.uniform(kb, (1, 1), jnp.float32, -bound2, bound2)

    y2 = jax.block_until_ready(
        domain_classifier_linear_fwd(x2, w2, b2, tm=128, force_pallas=True))
    assert y2.shape == (B2, 1)
    np.testing.assert_allclose(np.asarray(y2), _ref(x2, w2, b2), atol=2e-3, rtol=2e-3)

    # 3) bf16 activations (halved HBM traffic path), f32 accumulation.
    x2b = x2.astype(jnp.bfloat16)
    y2b = jax.block_until_ready(
        domain_classifier_linear_fwd(x2b, w2, b2, tm=128, force_pallas=True))
    assert y2b.shape == (B2, 1) and y2b.dtype == jnp.bfloat16
    ref_b = (np.asarray(x2b, np.float32) @ np.asarray(w2.astype(jnp.bfloat16),
                                                      np.float32).T
             + np.asarray(b2, np.float32))
    np.testing.assert_allclose(np.asarray(y2b, np.float32), ref_b, atol=1.5e-2, rtol=1.5e-2)

    # 4) Tiny-input fallback path (fused XLA GEMV).
    y_small = jax.block_until_ready(domain_classifier_linear_fwd(x, w, b))
    np.testing.assert_allclose(np.asarray(y_small), _ref(x, w, b), atol=2e-3, rtol=2e-3)

    print("KERNEL_OK")
</pallas_src>

<mosaic_0001>
module attributes {stable_mosaic.version = 11 : i64} {
  func.func @_linear1_kernel(%arg0: i32, %arg1: memref<8x256xf32, #tpu.memory_space<vmem>>, %arg2: memref<1x256xf32, #tpu.memory_space<vmem>>, %arg3: memref<1x1xf32, #tpu.memory_space<smem>>, %arg4: memref<1x8xf32, #tpu.memory_space<vmem>>) attributes {dimension_semantics = [#tpu.dimension_semantics<parallel>], iteration_bounds = array<i64: 1>, scalar_prefetch = 0 : i64, scratch_operands = 0 : i64, tpu.core_type = #tpu.core_type<tc>, window_params = [{transform_indices = @transform_0, window_bounds = array<i64: 8, 256>}, {pipeline_mode = #tpu.pipeline_mode<synchronous>, transform_indices = @transform_1, window_bounds = array<i64: 1, 256>}, {transform_indices = @transform_2, window_bounds = array<i64: 1, 1>}, {transform_indices = @transform_3, window_bounds = array<i64: 1, 8>}]} {
    %c0 = arith.constant 0 : index
    %c0_0 = arith.constant 0 : index
    %0 = vector.load %arg1[%c0, %c0_0] : memref<8x256xf32, #tpu.memory_space<vmem>>, vector<8x256xf32>
    %c0_1 = arith.constant 0 : index
    %c0_2 = arith.constant 0 : index
    %1 = vector.load %arg2[%c0_1, %c0_2] : memref<1x256xf32, #tpu.memory_space<vmem>>, vector<1x256xf32>
    %cst = arith.constant dense<0.000000e+00> : vector<1x8xf32>
    %2 = tpu.matmul %1, %0, %cst {dimension_numbers = #tpu.dot_dimension_numbers<[1], [1], [0], [0], [0, 0, 1, 0], [], []>, precision = #tpu.contract_precision<fp32>} : vector<1x256xf32>, vector<8x256xf32>, vector<1x8xf32> -> vector<1x8xf32>
    %c0_3 = arith.constant 0 : index
    %c0_4 = arith.constant 0 : index
    %3 = memref.load %arg3[%c0_3, %c0_4] : memref<1x1xf32, #tpu.memory_space<smem>>
    %4 = vector.broadcast %3 : f32 to vector<1x8xf32>
    %5 = arith.addf %2, %4 : vector<1x8xf32>
    %c0_5 = arith.constant 0 : index
    %c0_6 = arith.constant 0 : index
    %6 = vector.load %arg4[%c0_5, %c0_6] : memref<1x8xf32, #tpu.memory_space<vmem>>, vector<1x8xf32>
    tpu.vector_store %arg4[%c0_5, %c0_6], %5 {strides = array<i32>} : memref<1x8xf32, #tpu.memory_space<vmem>>, vector<1x8xf32>,
    return
  }
  func.func @transform_0(%arg0: i32) -> (i32, i32) {
    %c0_i32 = arith.constant 0 : i32
    %c0_i32_0 = arith.constant 0 : i32
    return %arg0, %c0_i32 : i32, i32
  }
  func.func @transform_1(%arg0: i32) -> (i32, i32) {
    %c0_i32 = arith.constant 0 : i32
    %c0_i32_0 = arith.constant 0 : i32
    %c0_i32_1 = arith.constant 0 : i32
    return %c0_i32, %c0_i32_0 : i32, i32
  }
  func.func @transform_2(%arg0: i32) -> (i32, i32) {
    %c0_i32 = arith.constant 0 : i32
    %c0_i32_0 = arith.constant 0 : i32
    %c0_i32_1 = arith.constant 0 : i32
    return %c0_i32, %c0_i32_0 : i32, i32
  }
  func.func @transform_3(%arg0: i32) -> (i32, i32) {
    %c0_i32 = arith.constant 0 : i32
    %c0_i32_0 = arith.constant 0 : i32
    return %c0_i32, %arg0 : i32, i32
  }
}

</mosaic_0001>

<llo_original>
// kernel: tpu_custom_call.1
$region0: #{tpu_custom_call.1}
  #allocation0 [shape = 'u32[]', space=smem, size = 0x4, offset = 0x4, fixed_abs, tag = 'smem constant byte address 0x4 - core index']
  #allocation1 [shape = 'u32[72,128]{1,0:T(1,128)}', space=vmem, size = 0x9000, scoped, tag = 'internal scratch']
  #allocation2 [shape = 'f32[1,1]{1,0:T(1,128)S(6)}', space=smem, size = 0x200, scoped, tag = 'scoped memory for tpu_custom_call.1']
  %s0 = inlined_call_operand.hbm [shape: f32[8,256], index: 0, kind: input, shape index: {}]
  %s1 = inlined_call_operand.vmem [shape: f32[1,256], index: 1, kind: input, shape index: {}]
  %s2 = inlined_call_operand.<no memory space> [shape: f32[1,1], index: 2, kind: input, shape index: {}]
  %s3 = inlined_call_operand.hbm [shape: f32[1,8], index: 3, kind: output, shape index: {}]
  %s4 = sld [smem:[#allocation0]]
  $region26: #{tpu_custom_call.1} parent=0
    _
  %s6 = ssub.s32 1, %s4
  %s7 = scalar_select 0, %s6, %s4
  %8 = sst [smem:[#allocation2]] %s2
  $region1: #{tpu_custom_call.1} parent=0
    #allocation3 [shape = 'u8[8192]{0}', space=vmem, size = 0x2000, scoped, tag = 'input window, operand 0, single buffered']
    #allocation4 [shape = 's32[1]{0}', space=sflag, size = 0x4, scoped, tag = 'scoped memory for tpu_custom_call.1']
    #allocation5 [shape = 's32[1]{0}', space=sflag, size = 0x4, scoped, tag = 'scoped memory for tpu_custom_call.1']
    #allocation6 [shape = 'u8[512]{0}', space=vmem, size = 0x400, scoped, tag = 'output window, operand 0, single buffered']
    %9 = vsyncpa [#allocation4], 0
    %10 = vsyncpa [#allocation5], 0
    // Predicated region
    $region2: #{tpu_custom_call.1} parent=1 // pred_check
      _
    $region3: #{tpu_custom_call.1} parent=1 // pred_check_branch
      %12 = sbr.rel (0) target = $region5
    $region4: #{tpu_custom_call.1} parent=1 // pred_region
      %14 = vsyncadd [#allocation4], 0
      %s16 = sshll.u32 %s0, 4
      %s17 = int_to_ptr.hbm [resolvable:$true] %s16
      %s18 = sshll.u32 [#allocation3], 4
      %s19 = int_to_ptr.vmem [resolvable:$true] %s18
      %21 = dma.hbm_to_vmem [thread:$0]  %s17, 256, %s19, [#allocation4]
    $region5: #{tpu_custom_call.1} parent=1 // pred_fallthru
      _
    // Predicated region
    $region6: #{tpu_custom_call.1} parent=1 // pred_check
      _
    $region7: #{tpu_custom_call.1} parent=1 // pred_check_branch
      %23 = sbr.rel (0) target = $region9
    $region8: #{tpu_custom_call.1} parent=1 // pred_region
      _
    $region9: #{tpu_custom_call.1} parent=1 // pred_fallthru
      _
    // Predicated region
    $region10: #{tpu_custom_call.1} parent=1 // pred_check
      _
    $region11: #{tpu_custom_call.1} parent=1 // pred_check_branch
      %25 = sbr.rel (0) target = $region13
    $region12: #{tpu_custom_call.1} parent=1 // pred_region
      _
    $region13: #{tpu_custom_call.1} parent=1 // pred_fallthru
      _
    // Predicated region
    $region14: #{tpu_custom_call.1} parent=1 // pred_check
      _
    $region15: #{tpu_custom_call.1} parent=1 // pred_check_branch
      %27 = sbr.rel (0) target = $region17
    $region16: #{tpu_custom_call.1} parent=1 // pred_region
      %29 = dma.done [#allocation4], 256
    $region17: #{tpu_custom_call.1} parent=1 // pred_fallthru
      _
    %v30 = vld [vmem:[#allocation3] sm:$0xff]
    %v31 = vld [vmem:[#allocation3 + $0x8] sm:$0xff]
    %v32 = vld [vmem:[%s1] sm:$0x3]
    %s33 = sld [smem:[#allocation2]]
    %v34 = vstv %s33
    %v36 = vperm.slane %v32, 0
    %v37 = vperm.slane %v32, 1
    %40 = vmatpush.xpose.msra.mxu0 0.0
    %41 = vmatpush.xpose.msra.mxu0 0.0
    %42 = vmatpush.xpose.msra.mxu0 0.0
    %43 = vmatpush.xpose.msra.mxu0 0.0
    %44 = vmatpush.xpose.msra.mxu0 0.0
    %45 = vmatpush.xpose.msra.mxu0 0.0
    %46 = vmatpush.xpose.msra.mxu0 0.0
    %47 = vmatpush.xpose.msra.mxu0 0.0
    %48 = vmatpush.xpose.msra.mxu0 0.0
    %49 = vmatpush.xpose.msra.mxu0 0.0
    %50 = vmatpush.xpose.msra.mxu0 0.0
    %51 = vmatpush.xpose.msra.mxu0 0.0
    %52 = vmatpush.xpose.msra.mxu0 0.0
    %53 = vmatpush.xpose.msra.mxu0 0.0
    %54 = vmatpush.xpose.msra.mxu0 0.0
    %v55 = vand.u32 %v30, 4294901760
    %56 = vmatpush.xpose.msra.mxu0 %v55
    %v57 = vand.u32 %v36, 4294901760
    %v58 = vsub.f32 %v36, %v57
    %v59 = vand.u32 %v58, 4294901760
    %v60 = vsub.f32 %v58, %v59
    %v61 = vand.u32 %v60, 4294901760
    %62 = vmatmul.f32.gmra.mxu0 %v61
    %v63 = vpop.f32.mrf.mxu0
    %v64 = vadd.f32 %v34, %v63
    %65 = vdwg.mxu0
    %66 = vmatpush.xpose.msra.mxu0 0.0
    %67 = vmatpush.xpose.msra.mxu0 0.0
    %68 = vmatpush.xpose.msra.mxu0 0.0
    %69 = vmatpush.xpose.msra.mxu0 0.0
    %70 = vmatpush.xpose.msra.mxu0 0.0
    %71 = vmatpush.xpose.msra.mxu0 0.0
    %72 = vmatpush.xpose.msra.mxu0 0.0
    %73 = vmatpush.xpose.msra.mxu0 0.0
    %74 = vmatpush.xpose.msra.mxu0 0.0
    %75 = vmatpush.xpose.msra.mxu0 0.0
    %76 = vmatpush.xpose.msra.mxu0 0.0
    %77 = vmatpush.xpose.msra.mxu0 0.0
    %78 = vmatpush.xpose.msra.mxu0 0.0
    %79 = vmatpush.xpose.msra.mxu0 0.0
    %80 = vmatpush.xpose.msra.mxu0 0.0
    %v81 = vand.u32 %v30, 4294901760
    %v82 = vsub.f32 %v30, %v81
    %v83 = vand.u32 %v82, 4294901760
    %v84 = vsub.f32 %v82, %v83
    %v85 = vand.u32 %v84, 4294901760
    %86 = vmatpush.xpose.msra.mxu0 %v85
    %v87 = vand.u32 %v36, 4294901760
    %88 = vmatmul.f32.gmra.mxu0 %v87
    %v89 = vpop.f32.mrf.mxu0
    %v90 = vadd.f32 %v64, %v89
    %91 = vdwg.mxu0
    %92 = vmatpush.xpose.msra.mxu0 0.0
    %93 = vmatpush.xpose.msra.mxu0 0.0
    %94 = vmatpush.xpose.msra.mxu0 0.0
    %95 = vmatpush.xpose.msra.mxu0 0.0
    %96 = vmatpush.xpose.msra.mxu0 0.0
    %97 = vmatpush.xpose.msra.mxu0 0.0
    %98 = vmatpush.xpose.msra.mxu0 0.0
    %99 = vmatpush.xpose.msra.mxu0 0.0
    %100 = vmatpush.xpose.msra.mxu0 0.0
    %101 = vmatpush.xpose.msra.mxu0 0.0
    %102 = vmatpush.xpose.msra.mxu0 0.0
    %103 = vmatpush.xpose.msra.mxu0 0.0
    %104 = vmatpush.xpose.msra.mxu0 0.0
    %105 = vmatpush.xpose.msra.mxu0 0.0
    %106 = vmatpush.xpose.msra.mxu0 0.0
    %v107 = vand.u32 %v30, 4294901760
    %v108 = vsub.f32 %v30, %v107
    %109 = vmatpush.xpose.msra.mxu0 %v108
    %v110 = vand.u32 %v36, 4294901760
    %v111 = vsub.f32 %v36, %v110
    %112 = vmatmul.f32.gmra.mxu0 %v111
    %v113 = vpop.f32.mrf.mxu0
    %v114 = vadd.f32 %v90, %v113
    %115 = vdwg.mxu0
    %116 = vmatpush.xpose.msra.mxu0 0.0
    %117 = vmatpush.xpose.msra.mxu0 0.0
    %118 = vmatpush.xpose.msra.mxu0 0.0
    %119 = vmatpush.xpose.msra.mxu0 0.0
    %120 = vmatpush.xpose.msra.mxu0 0.0
    %121 = vmatpush.xpose.msra.mxu0 0.0
    %122 = vmatpush.xpose.msra.mxu0 0.0
    %123 = vmatpush.xpose.msra.mxu0 0.0
    %124 = vmatpush.xpose.msra.mxu0 0.0
    %125 = vmatpush.xpose.msra.mxu0 0.0
    %126 = vmatpush.xpose.msra.mxu0 0.0
    %127 = vmatpush.xpose.msra.mxu0 0.0
    %128 = vmatpush.xpose.msra.mxu0 0.0
    %129 = vmatpush.xpose.msra.mxu0 0.0
    %130 = vmatpush.xpose.msra.mxu0 0.0
    %v131 = vand.u32 %v30, 4294901760
    %132 = vmatpush.xpose.msra.mxu0 %v131
    %v133 = vand.u32 %v36, 4294901760
    %v134 = vsub.f32 %v36, %v133
    %v135 = vand.u32 %v134, 4294901760
    %136 = vmatmul.f32.gmra.mxu0 %v135
    %v137 = vpop.f32.mrf.mxu0
    %v138 = vadd.f32 %v114, %v137
    %139 = vdwg.mxu0
    %140 = vmatpush.xpose.msra.mxu0 0.0
    %141 = vmatpush.xpose.msra.mxu0 0.0
    %142 = vmatpush.xpose.msra.mxu0 0.0
    %143 = vmatpush.xpose.msra.mxu0 0.0
    %144 = vmatpush.xpose.msra.mxu0 0.0
    %145 = vmatpush.xpose.msra.mxu0 0.0
    %146 = vmatpush.xpose.msra.mxu0 0.0
    %147 = vmatpush.xpose.msra.mxu0 0.0
    %148 = vmatpush.xpose.msra.mxu0 0.0
    %149 = vmatpush.xpose.msra.mxu0 0.0
    %150 = vmatpush.xpose.msra.mxu0 0.0
    %151 = vmatpush.xpose.msra.mxu0 0.0
    %152 = vmatpush.xpose.msra.mxu0 0.0
    %153 = vmatpush.xpose.msra.mxu0 0.0
    %154 = vmatpush.xpose.msra.mxu0 0.0
    %v155 = vand.u32 %v30, 4294901760
    %v156 = vsub.f32 %v30, %v155
    %v157 = vand.u32 %v156, 4294901760
    %158 = vmatpush.xpose.msra.mxu0 %v157
    %v159 = vand.u32 %v36, 4294901760
    %160 = vmatmul.f32.gmra.mxu0 %v159
    %v161 = vpop.f32.mrf.mxu0
    %v162 = vadd.f32 %v138, %v161
    %163 = vdwg.mxu0
    %164 = vmatpush.xpose.msra.mxu0 0.0
    %165 = vmatpush.xpose.msra.mxu0 0.0
    %166 = vmatpush.xpose.msra.mxu0 0.0
    %167 = vmatpush.xpose.msra.mxu0 0.0
    %168 = vmatpush.xpose.msra.mxu0 0.0
    %169 = vmatpush.xpose.msra.mxu0 0.0
    %170 = vmatpush.xpose.msra.mxu0 0.0
    %171 = vmatpush.xpose.msra.mxu0 0.0
    %172 = vmatpush.xpose.msra.mxu0 0.0
    %173 = vmatpush.xpose.msra.mxu0 0.0
    %174 = vmatpush.xpose.msra.mxu0 0.0
    %175 = vmatpush.xpose.msra.mxu0 0.0
    %176 = vmatpush.xpose.msra.mxu0 0.0
    %177 = vmatpush.xpose.msra.mxu0 0.0
    %178 = vmatpush.xpose.msra.mxu0 0.0
    %v179 = vand.u32 %v30, 4294901760
    %180 = vmatpush.xpose.msra.mxu0 %v179
    %v181 = vand.u32 %v36, 4294901760
    %182 = vmatmul.f32.gmra.mxu0 %v181
    %v183 = vpop.f32.mrf.mxu0
    %v184 = vadd.f32 %v162, %v183
    %185 = vdwg.mxu0
    %186 = vmatpush.xpose.msra.mxu0 0.0
    %187 = vmatpush.xpose.msra.mxu0 0.0
    %188 = vmatpush.xpose.msra.mxu0 0.0
    %189 = vmatpush.xpose.msra.mxu0 0.0
    %190 = vmatpush.xpose.msra.mxu0 0.0
    %191 = vmatpush.xpose.msra.mxu0 0.0
    %192 = vmatpush.xpose.msra.mxu0 0.0
    %193 = vmatpush.xpose.msra.mxu0 0.0
    %194 = vmatpush.xpose.msra.mxu0 0.0
    %195 = vmatpush.xpose.msra.mxu0 0.0
    %196 = vmatpush.xpose.msra.mxu0 0.0
    %197 = vmatpush.xpose.msra.mxu0 0.0
    %198 = vmatpush.xpose.msra.mxu0 0.0
    %199 = vmatpush.xpose.msra.mxu0 0.0
    %200 = vmatpush.xpose.msra.mxu0 0.0
    %v201 = vand.u32 %v31, 4294901760
    %202 = vmatpush.xpose.msra.mxu0 %v201
    %v203 = vand.u32 %v37, 4294901760
    %v204 = vsub.f32 %v37, %v203
    %v205 = vand.u32 %v204, 4294901760
    %v206 = vsub.f32 %v204, %v205
    %v207 = vand.u32 %v206, 4294901760
    %208 = vmatmul.f32.gmra.mxu0 %v207
    %v209 = vpop.f32.mrf.mxu0
    %v210 = vadd.f32 %v184, %v209
    %211 = vdwg.mxu0
    %212 = vmatpush.xpose.msra.mxu0 0.0
    %213 = vmatpush.xpose.msra.mxu0 0.0
    %214 = vmatpush.xpose.msra.mxu0 0.0
    %215 = vmatpush.xpose.msra.mxu0 0.0
    %216 = vmatpush.xpose.msra.mxu0 0.0
    %217 = vmatpush.xpose.msra.mxu0 0.0
    %218 = vmatpush.xpose.msra.mxu0 0.0
    %219 = vmatpush.xpose.msra.mxu0 0.0
    %220 = vmatpush.xpose.msra.mxu0 0.0
    %221 = vmatpush.xpose.msra.mxu0 0.0
    %222 = vmatpush.xpose.msra.mxu0 0.0
    %223 = vmatpush.xpose.msra.mxu0 0.0
    %224 = vmatpush.xpose.msra.mxu0 0.0
    %225 = vmatpush.xpose.msra.mxu0 0.0
    %226 = vmatpush.xpose.msra.mxu0 0.0
    %v227 = vand.u32 %v31, 4294901760
    %v228 = vsub.f32 %v31, %v227
    %v229 = vand.u32 %v228, 4294901760
    %v230 = vsub.f32 %v228, %v229
    %v231 = vand.u32 %v230, 4294901760
    %232 = vmatpush.xpose.msra.mxu0 %v231
    %v233 = vand.u32 %v37, 4294901760
    %234 = vmatmul.f32.gmra.mxu0 %v233
    %v235 = vpop.f32.mrf.mxu0
    %v236 = vadd.f32 %v210, %v235
    %237 = vdwg.mxu0
    %238 = vmatpush.xpose.msra.mxu0 0.0
    %239 = vmatpush.xpose.msra.mxu0 0.0
    %240 = vmatpush.xpose.msra.mxu0 0.0
    %241 = vmatpush.xpose.msra.mxu0 0.0
    %242 = vmatpush.xpose.msra.mxu0 0.0
    %243 = vmatpush.xpose.msra.mxu0 0.0
    %244 = vmatpush.xpose.msra.mxu0 0.0
    %245 = vmatpush.xpose.msra.mxu0 0.0
    %246 = vmatpush.xpose.msra.mxu0 0.0
    %247 = vmatpush.xpose.msra.mxu0 0.0
    %248 = vmatpush.xpose.msra.mxu0 0.0
    %249 = vmatpush.xpose.msra.mxu0 0.0
    %250 = vmatpush.xpose.msra.mxu0 0.0
    %251 = vmatpush.xpose.msra.mxu0 0.0
    %252 = vmatpush.xpose.msra.mxu0 0.0
    %v253 = vand.u32 %v31, 4294901760
    %v254 = vsub.f32 %v31, %v253
    %255 = vmatpush.xpose.msra.mxu0 %v254
    %v256 = vand.u32 %v37, 4294901760
    %v257 = vsub.f32 %v37, %v256
    %258 = vmatmul.f32.gmra.mxu0 %v257
    %v259 = vpop.f32.mrf.mxu0
    %v260 = vadd.f32 %v236, %v259
    %261 = vdwg.mxu0
    %262 = vmatpush.xpose.msra.mxu0 0.0
    %263 = vmatpush.xpose.msra.mxu0 0.0
    %264 = vmatpush.xpose.msra.mxu0 0.0
    %265 = vmatpush.xpose.msra.mxu0 0.0
    %266 = vmatpush.xpose.msra.mxu0 0.0
    %267 = vmatpush.xpose.msra.mxu0 0.0
    %268 = vmatpush.xpose.msra.mxu0 0.0
    %269 = vmatpush.xpose.msra.mxu0 0.0
    %270 = vmatpush.xpose.msra.mxu0 0.0
    %271 = vmatpush.xpose.msra.mxu0 0.0
    %272 = vmatpush.xpose.msra.mxu0 0.0
    %273 = vmatpush.xpose.msra.mxu0 0.0
    %274 = vmatpush.xpose.msra.mxu0 0.0
    %275 = vmatpush.xpose.msra.mxu0 0.0
    %276 = vmatpush.xpose.msra.mxu0 0.0
    %v277 = vand.u32 %v31, 4294901760
    %278 = vmatpush.xpose.msra.mxu0 %v277
    %v279 = vand.u32 %v37, 4294901760
    %v280 = vsub.f32 %v37, %v279
    %v281 = vand.u32 %v280, 4294901760
    %282 = vmatmul.f32.gmra.mxu0 %v281
    %v283 = vpop.f32.mrf.mxu0
    %v284 = vadd.f32 %v260, %v283
    %285 = vdwg.mxu0
    %286 = vmatpush.xpose.msra.mxu0 0.0
    %287 = vmatpush.xpose.msra.mxu0 0.0
    %288 = vmatpush.xpose.msra.mxu0 0.0
    %289 = vmatpush.xpose.msra.mxu0 0.0
    %290 = vmatpush.xpose.msra.mxu0 0.0
    %291 = vmatpush.xpose.msra.mxu0 0.0
    %292 = vmatpush.xpose.msra.mxu0 0.0
    %293 = vmatpush.xpose.msra.mxu0 0.0
    %294 = vmatpush.xpose.msra.mxu0 0.0
    %295 = vmatpush.xpose.msra.mxu0 0.0
    %296 = vmatpush.xpose.msra.mxu0 0.0
    %297 = vmatpush.xpose.msra.mxu0 0.0
    %298 = vmatpush.xpose.msra.mxu0 0.0
    %299 = vmatpush.xpose.msra.mxu0 0.0
    %300 = vmatpush.xpose.msra.mxu0 0.0
    %v301 = vand.u32 %v31, 4294901760
    %v302 = vsub.f32 %v31, %v301
    %v303 = vand.u32 %v302, 4294901760
    %304 = vmatpush.xpose.msra.mxu0 %v303
    %v305 = vand.u32 %v37, 4294901760
    %306 = vmatmul.f32.gmra.mxu0 %v305
    %v307 = vpop.f32.mrf.mxu0
    %v308 = vadd.f32 %v284, %v307
    %309 = vdwg.mxu0
    %310 = vmatpush.xpose.msra.mxu0 0.0
    %311 = vmatpush.xpose.msra.mxu0 0.0
    %312 = vmatpush.xpose.msra.mxu0 0.0
    %313 = vmatpush.xpose.msra.mxu0 0.0
    %314 = vmatpush.xpose.msra.mxu0 0.0
    %315 = vmatpush.xpose.msra.mxu0 0.0
    %316 = vmatpush.xpose.msra.mxu0 0.0
    %317 = vmatpush.xpose.msra.mxu0 0.0
    %318 = vmatpush.xpose.msra.mxu0 0.0
    %319 = vmatpush.xpose.msra.mxu0 0.0
    %320 = vmatpush.xpose.msra.mxu0 0.0
    %321 = vmatpush.xpose.msra.mxu0 0.0
    %322 = vmatpush.xpose.msra.mxu0 0.0
    %323 = vmatpush.xpose.msra.mxu0 0.0
    %324 = vmatpush.xpose.msra.mxu0 0.0
    %v325 = vand.u32 %v31, 4294901760
    %326 = vmatpush.xpose.msra.mxu0 %v325
    %v327 = vand.u32 %v37, 4294901760
    %328 = vmatmul.f32.gmra.mxu0 %v327
    %v329 = vpop.f32.mrf.mxu0
    %v330 = vadd.f32 %v308, %v329
    %331 = vdwg.mxu0
    %vm332 = vcmask 57344
    %333 = vst.msk [vmem:[#allocation6] sm:$0x1] %vm332, %v330
    // Predicated region
    $region18: #{tpu_custom_call.1} parent=1 // pred_check
      _
    $region19: #{tpu_custom_call.1} parent=1 // pred_check_branch
      %335 = sbr.rel (0) target = $region21
    $region20: #{tpu_custom_call.1} parent=1 // pred_region
      %337 = vsyncadd [#allocation5], 0
      %s339 = sshll.u32 [#allocation6], 4
      %s340 = int_to_ptr.vmem [resolvable:$true] %s339
      %s341 = sshll.u32 %s3, 4
      %s342 = int_to_ptr.hbm [resolvable:$true] %s341
      %344 = dma.vmem_to_hbm [thread:$0]  %s340, 16, %s342, [#allocation5]
    $region21: #{tpu_custom_call.1} parent=1 // pred_fallthru
      _
    // Predicated region
    $region22: #{tpu_custom_call.1} parent=1 // pred_check
      _
    $region23: #{tpu_custom_call.1} parent=1 // pred_check_branch
      %346 = sbr.rel (0) target = $region25
    $region24: #{tpu_custom_call.1} parent=1 // pred_region
      %348 = dma.done [#allocation5], 16
    $region25: #{tpu_custom_call.1} parent=1 // pred_fallthru
      _
    %349 = vsyncpa [#allocation4], 1
    %350 = vsyncpa [#allocation5], 1

</llo_original>
